<compile_context>
chip_gen: v7x
topology: tpu7x:2x2x1
jax: 0.10.0
libtpu: 0.0.40
codegen_flags: <defaults>
</compile_context>

<pallas_src>
import jax
import jax.numpy as jnp
import numpy as np
from jax.experimental import pallas as pl
from jax.experimental.pallas import tpu as pltpu

_EPS = 1e-5
_PAD = 16   # halo block per packed-image group; multiple of the bf16 sublane tile (16 rows)


def _make_kernel(G, H, LANES, cnt):
    HP = H + _PAD   # rows per packed-image group inside the padded scratch

    def kernel(x_ref, wr1_ref, wr2_ref, g1_ref, b1_ref, g2_ref, b2_ref, s_ref,
               o_ref, xp_ref, acc_ref):
        # xp_ref: (G*HP + _PAD, LANES) bf16 scratch = current conv input with zero row-halo.
        # Zero only the halo/pad blocks (sublane-tile aligned); interiors are fully
        # overwritten before every conv, halos stay zero.
        for g in range(G + 1):
            xp_ref[g * HP:g * HP + _PAD, :] = jnp.zeros((_PAD, LANES), xp_ref.dtype)

        def stage(vals):
            # Cast to bf16 once here (not per-dy inside conv).  Interior writes start at
            # multiples of 16 rows -> aligned, unmasked stores for the packed bf16 layout.
            for g in range(G):
                xp_ref[g * HP + _PAD:g * HP + _PAD + H, :] = (
                    vals[g * H:(g + 1) * H, :].astype(jnp.bfloat16))

        def conv(wr_ref):
            # One (H, LANES) @ (LANES, LANES) MXU dot per kernel row per packed group, with
            # the dot and its accumulation into the f32 scratch kept adjacent.  At the toy
            # shape G == 1, i.e. exactly 3 dots per conv and each weight band loaded once.
            # TODO(synk): for G > 1 merge the groups into the M dimension of a single dot
            # per dy (masking the inter-group boundary rows before BN).
            for g in range(G):
                src, dst = g * HP + _PAD - 1, g * H
                acc_ref[dst:dst + H, :] = jnp.dot(
                    xp_ref[src:src + H, :], wr_ref[0],
                    preferred_element_type=jnp.float32)
                for dy in (1, 2):
                    acc_ref[dst:dst + H, :] += jnp.dot(
                        xp_ref[src + dy:src + dy + H, :], wr_ref[dy],
                        preferred_element_type=jnp.float32)
            return acc_ref[...]

        def batchnorm(y, g_ref, b_ref):
            # Per-channel batch stats over (N, H, W).  The 0/1 matrix s_ref both reduces over
            # the (image, W) positions packed into the lane dim and re-broadcasts: no reshapes.
            # Numerically-stable two-pass variance E[(x-mean)^2]; stats stay f32.
            mean = jnp.dot(jnp.sum(y, axis=0, keepdims=True), s_ref[...],
                           preferred_element_type=jnp.float32) / cnt
            d = y - mean
            var = jnp.dot(jnp.sum(d * d, axis=0, keepdims=True), s_ref[...],
                          preferred_element_type=jnp.float32) / cnt
            return d * jax.lax.rsqrt(var + _EPS) * g_ref[...] + b_ref[...]

        stage(x_ref[...])
        y1 = batchnorm(conv(wr1_ref), g1_ref, b1_ref)
        stage(y1)                                   # conv1 output never leaves VMEM
        y2 = batchnorm(conv(wr2_ref), g2_ref, b2_ref)
        # Re-read x_ref here for the residual add instead of keeping the whole slab live
        # across both convs/BNs (frees vregs during the heavy part of the kernel).
        o_ref[...] = jnp.maximum(y2 + x_ref[...], 0.0)

    return kernel


def _band_weights(w_hwio, width, pack):
    """(3,3,Cin,Cout) HWIO -> (3, pack*width*Cin, pack*width*Cout) bf16 banded conv weights.

    band[dy][w_in*Cin+ci, w_out*Cout+co] = w[dy, w_in - w_out + 1, ci, co] (0 outside the
    band) realizes all dx taps AND the W-direction zero padding as one matmul per dy on a
    lane-dense slab; kron(eye(pack), band) keeps the `pack` images packed into the lane
    dimension independent of each other.
    """
    kh, kw, cin, cout = w_hwio.shape
    eye_p = jnp.eye(pack, dtype=jnp.float32)
    mats = []
    for dy in range(kh):
        m = jnp.zeros((width * cin, width * cout), jnp.float32)
        for dx in range(kw):
            sel = jnp.eye(width, k=1 - dx, dtype=jnp.float32)   # w_in == w_out + dx - 1
            m = m + jnp.kron(sel, w_hwio[dy, dx].astype(jnp.float32))
        mats.append(jnp.kron(eye_p, m))
    return jnp.stack(mats).astype(jnp.bfloat16)


def prepare_params(w1, w2, g1, b1, g2, b2, *, width, channels, pack):
    """One-off parameter packing, hoisted out of the per-call path (only changes when the
    conv/BN weights change)."""
    lanes = pack * width * channels
    wr1 = _band_weights(w1, width, pack)
    wr2 = _band_weights(w2, width, pack)
    g1t, b1t, g2t, b2t = (jnp.tile(v.astype(jnp.float32), pack * width).reshape(1, lanes)
                          for v in (g1, b1, g2, b2))
    # 0/1 channel-sum matrix: lane j of (row @ s) = sum over lanes i with i % C == j % C.
    lane = jnp.arange(lanes)
    s = (lane[:, None] % channels == lane[None, :] % channels).astype(jnp.float32)
    return (wr1, wr2, g1t, b1t, g2t, b2t, s)


def _choose_pack(N, W, C):
    p = max(1, 128 // (W * C))      # images packed side-by-side along the 128-lane dim
    while p > 1 and N % p != 0:
        p -= 1
    return p


@jax.jit
def residual_block(x_nchw, params):
    """x_nchw: (N, C, H, W) f32; params: output of prepare_params()."""
    wr1, wr2, g1t, b1t, g2t, b2t, s = params
    N, C, H, W = x_nchw.shape
    WC = W * C
    LANES = wr1.shape[1]
    P = LANES // WC                 # images packed per lane row
    G = N // P                      # packed-image groups (row-slab blocks)
    cnt = float(N * H * W)

    # NCHW -> lane-dense packed slab: P images side by side along lanes -> (G*H, P*W*C).
    x2d = (jnp.transpose(x_nchw, (0, 2, 3, 1)).astype(jnp.float32)
           .reshape(G, P, H, WC).transpose(0, 2, 1, 3).reshape(G * H, LANES))

    # Executed banded-matmul FLOPs (2 convs x G groups x 3 dy), not the nominal conv FLOPs.
    flops = 2 * G * 3 * 2 * H * LANES * LANES
    bytes_accessed = (4 * 2 * G * H * LANES + 2 * (wr1.size + wr2.size)
                      + 4 * (4 * LANES + s.size))

    out2d = pl.pallas_call(
        _make_kernel(G, H, LANES, cnt),
        out_shape=jax.ShapeDtypeStruct((G * H, LANES), jnp.float32),
        in_specs=[pl.BlockSpec(memory_space=pltpu.MemorySpace.VMEM)] * 8,
        out_specs=pl.BlockSpec(memory_space=pltpu.MemorySpace.VMEM),
        scratch_shapes=[pltpu.VMEM((G * (H + _PAD) + _PAD, LANES), jnp.bfloat16),  # padded acts
                        pltpu.VMEM((G * H, LANES), jnp.float32)],                   # f32 conv acc
        compiler_params=pltpu.CompilerParams(vmem_limit_bytes=32 * 1024 * 1024),
        cost_estimate=pl.CostEstimate(flops=flops, transcendentals=2 * LANES,
                                      bytes_accessed=bytes_accessed),
    )(x2d, wr1, wr2, g1t, b1t, g2t, b2t, s)

    # TODO(synk): at ResNet-scale shapes this needs (a) a tiled grid over N/H row-tiles with a
    # two-pass BN (per-tile sum/sumsq, then normalize) and dimension_semantics=("parallel",)
    # so both v7x TensorCores are used, and (b) im2col-style (pixels, 9C)@(9C, C) weights (or
    # per-tap (C,C) weights with pltpu.roll lane shifts) since the banded (W*C)^2 weights stop
    # fitting 64 MiB VMEM at real widths.
    return jnp.transpose(
        out2d.reshape(G, H, P, WC).transpose(0, 2, 1, 3).reshape(N, H, W, C),
        (0, 3, 1, 2))


def _reference(x_nchw, w1, w2, g1, b1, g2, b2):
    x = jnp.transpose(x_nchw, (0, 2, 3, 1))

    def conv(v, w):
        return jax.lax.conv_general_dilated(
            v, w, window_strides=(1, 1), padding=((1, 1), (1, 1)),
            dimension_numbers=("NHWC", "HWIO", "NHWC"))

    def bn(v, g, b):
        mean = jnp.mean(v, axis=(0, 1, 2), keepdims=True)
        var = jnp.mean((v - mean) ** 2, axis=(0, 1, 2), keepdims=True)
        return (v - mean) * jax.lax.rsqrt(var + _EPS) * g + b

    y = bn(conv(x, w1), g1, b1)
    y = bn(conv(y, w2), g2, b2)
    y = jnp.maximum(y + x, 0.0)
    return jnp.transpose(y, (0, 3, 1, 2))


if __name__ == "__main__":
    N, C, H, W = 2, 4, 16, 16          # inplanes == outplanes (required by the module)
    key = jax.random.PRNGKey(0)
    kx, k1, k2, kg1, kb1, kg2, kb2 = jax.random.split(key, 7)
    x = jax.random.normal(kx, (N, C, H, W), jnp.float32)
    w1 = 0.1 * jax.random.normal(k1, (3, 3, C, C), jnp.float32)    # HWIO
    w2 = 0.1 * jax.random.normal(k2, (3, 3, C, C), jnp.float32)
    g1 = 1.0 + 0.1 * jax.random.normal(kg1, (C,), jnp.float32)
    b1 = 0.1 * jax.random.normal(kb1, (C,), jnp.float32)
    g2 = 1.0 + 0.1 * jax.random.normal(kg2, (C,), jnp.float32)
    b2 = 0.1 * jax.random.normal(kb2, (C,), jnp.float32)

    pack = _choose_pack(N, W, C)       # = 2 here -> 128-lane slabs
    params = prepare_params(w1, w2, g1, b1, g2, b2, width=W, channels=C, pack=pack)
    out = jax.block_until_ready(residual_block(x, params))

    ref = _reference(x, w1, w2, g1, b1, g2, b2)
    err = float(jnp.max(jnp.abs(out - ref)))
    if not np.isfinite(err) or err > 5e-2:
        raise AssertionError(f"mismatch vs reference, max abs err = {err}")
    print("KERNEL_OK")
</pallas_src>

<mosaic_0001>
module attributes {stable_mosaic.version = 11 : i64} {
  func.func @kernel(%arg0: memref<16x128xf32, #tpu.memory_space<vmem>>, %arg1: memref<3x128x128xbf16, #tpu.memory_space<vmem>>, %arg2: memref<3x128x128xbf16, #tpu.memory_space<vmem>>, %arg3: memref<1x128xf32, #tpu.memory_space<vmem>>, %arg4: memref<1x128xf32, #tpu.memory_space<vmem>>, %arg5: memref<1x128xf32, #tpu.memory_space<vmem>>, %arg6: memref<1x128xf32, #tpu.memory_space<vmem>>, %arg7: memref<128x128xf32, #tpu.memory_space<vmem>>, %arg8: memref<16x128xf32, #tpu.memory_space<vmem>>, %arg9: memref<48x128xbf16, #tpu.memory_space<vmem>>, %arg10: memref<16x128xf32, #tpu.memory_space<vmem>>) attributes {dimension_semantics = [], scalar_prefetch = 0 : i64, scratch_operands = 2 : i64, tpu.core_type = #tpu.core_type<tc>} {
    %cst = arith.constant 0.000000e+00 : bf16
    %0 = vector.broadcast %cst : bf16 to vector<16x128xbf16>
    %c0 = arith.constant 0 : index
    %c0_0 = arith.constant 0 : index
    %1 = vector.load %arg9[%c0, %c0_0] : memref<48x128xbf16, #tpu.memory_space<vmem>>, vector<16x128xbf16>
    tpu.vector_store %arg9[%c0, %c0_0], %0 {strides = array<i32>} : memref<48x128xbf16, #tpu.memory_space<vmem>>, vector<16x128xbf16>,
    %cst_1 = arith.constant 0.000000e+00 : bf16
    %2 = vector.broadcast %cst_1 : bf16 to vector<16x128xbf16>
    %c32 = arith.constant 32 : index
    %c0_2 = arith.constant 0 : index
    %3 = vector.load %arg9[%c32, %c0_2] : memref<48x128xbf16, #tpu.memory_space<vmem>>, vector<16x128xbf16>
    tpu.vector_store %arg9[%c32, %c0_2], %2 {strides = array<i32>} : memref<48x128xbf16, #tpu.memory_space<vmem>>, vector<16x128xbf16>,
    %c0_3 = arith.constant 0 : index
    %c0_4 = arith.constant 0 : index
    %4 = vector.load %arg0[%c0_3, %c0_4] : memref<16x128xf32, #tpu.memory_space<vmem>>, vector<16x128xf32>
    %5 = arith.truncf %4 : vector<16x128xf32> to vector<16x128xbf16>
    %c16 = arith.constant 16 : index
    %c0_5 = arith.constant 0 : index
    %6 = vector.load %arg9[%c16, %c0_5] : memref<48x128xbf16, #tpu.memory_space<vmem>>, vector<16x128xbf16>
    tpu.vector_store %arg9[%c16, %c0_5], %5 {strides = array<i32>} : memref<48x128xbf16, #tpu.memory_space<vmem>>, vector<16x128xbf16>,
    %c15 = arith.constant 15 : index
    %c0_6 = arith.constant 0 : index
    %7 = vector.load %arg9[%c15, %c0_6] : memref<48x128xbf16, #tpu.memory_space<vmem>>, vector<16x128xbf16>
    %c0_7 = arith.constant 0 : index
    %c0_8 = arith.constant 0 : index
    %c0_9 = arith.constant 0 : index
    %8 = vector.load %arg1[%c0_7, %c0_8, %c0_9] : memref<3x128x128xbf16, #tpu.memory_space<vmem>>, vector<1x128x128xbf16>
    %9 = vector.shape_cast %8 : vector<1x128x128xbf16> to vector<128x128xbf16>
    %cst_10 = arith.constant dense<0.000000e+00> : vector<16x128xf32>
    %10 = tpu.matmul %7, %9, %cst_10 {dimension_numbers = #tpu.dot_dimension_numbers<[1], [0], [0], [1], [0, 0, 1, 1], [], []>} : vector<16x128xbf16>, vector<128x128xbf16>, vector<16x128xf32> -> vector<16x128xf32>
    %c0_11 = arith.constant 0 : index
    %c0_12 = arith.constant 0 : index
    %11 = vector.load %arg10[%c0_11, %c0_12] : memref<16x128xf32, #tpu.memory_space<vmem>>, vector<16x128xf32>
    tpu.vector_store %arg10[%c0_11, %c0_12], %10 {strides = array<i32>} : memref<16x128xf32, #tpu.memory_space<vmem>>, vector<16x128xf32>,
    %c0_13 = arith.constant 0 : index
    %c0_14 = arith.constant 0 : index
    %12 = vector.load %arg10[%c0_13, %c0_14] : memref<16x128xf32, #tpu.memory_space<vmem>>, vector<16x128xf32>
    %c16_15 = arith.constant 16 : index
    %c0_16 = arith.constant 0 : index
    %13 = vector.load %arg9[%c16_15, %c0_16] : memref<48x128xbf16, #tpu.memory_space<vmem>>, vector<16x128xbf16>
    %c1 = arith.constant 1 : index
    %c0_17 = arith.constant 0 : index
    %c0_18 = arith.constant 0 : index
    %14 = vector.load %arg1[%c1, %c0_17, %c0_18] : memref<3x128x128xbf16, #tpu.memory_space<vmem>>, vector<1x128x128xbf16>
    %15 = vector.shape_cast %14 : vector<1x128x128xbf16> to vector<128x128xbf16>
    %cst_19 = arith.constant dense<0.000000e+00> : vector<16x128xf32>
    %16 = tpu.matmul %13, %15, %cst_19 {dimension_numbers = #tpu.dot_dimension_numbers<[1], [0], [0], [1], [0, 0, 1, 1], [], []>} : vector<16x128xbf16>, vector<128x128xbf16>, vector<16x128xf32> -> vector<16x128xf32>
    %17 = arith.addf %12, %16 : vector<16x128xf32>
    %c0_20 = arith.constant 0 : index
    %c0_21 = arith.constant 0 : index
    %18 = vector.load %arg10[%c0_20, %c0_21] : memref<16x128xf32, #tpu.memory_space<vmem>>, vector<16x128xf32>
    tpu.vector_store %arg10[%c0_20, %c0_21], %17 {strides = array<i32>} : memref<16x128xf32, #tpu.memory_space<vmem>>, vector<16x128xf32>,
    %c0_22 = arith.constant 0 : index
    %c0_23 = arith.constant 0 : index
    %19 = vector.load %arg10[%c0_22, %c0_23] : memref<16x128xf32, #tpu.memory_space<vmem>>, vector<16x128xf32>
    %c17 = arith.constant 17 : index
    %c0_24 = arith.constant 0 : index
    %20 = vector.load %arg9[%c17, %c0_24] : memref<48x128xbf16, #tpu.memory_space<vmem>>, vector<16x128xbf16>
    %c2 = arith.constant 2 : index
    %c0_25 = arith.constant 0 : index
    %c0_26 = arith.constant 0 : index
    %21 = vector.load %arg1[%c2, %c0_25, %c0_26] : memref<3x128x128xbf16, #tpu.memory_space<vmem>>, vector<1x128x128xbf16>
    %22 = vector.shape_cast %21 : vector<1x128x128xbf16> to vector<128x128xbf16>
    %cst_27 = arith.constant dense<0.000000e+00> : vector<16x128xf32>
    %23 = tpu.matmul %20, %22, %cst_27 {dimension_numbers = #tpu.dot_dimension_numbers<[1], [0], [0], [1], [0, 0, 1, 1], [], []>} : vector<16x128xbf16>, vector<128x128xbf16>, vector<16x128xf32> -> vector<16x128xf32>
    %24 = arith.addf %19, %23 : vector<16x128xf32>
    %c0_28 = arith.constant 0 : index
    %c0_29 = arith.constant 0 : index
    %25 = vector.load %arg10[%c0_28, %c0_29] : memref<16x128xf32, #tpu.memory_space<vmem>>, vector<16x128xf32>
    tpu.vector_store %arg10[%c0_28, %c0_29], %24 {strides = array<i32>} : memref<16x128xf32, #tpu.memory_space<vmem>>, vector<16x128xf32>,
    %c0_30 = arith.constant 0 : index
    %c0_31 = arith.constant 0 : index
    %26 = vector.load %arg10[%c0_30, %c0_31] : memref<16x128xf32, #tpu.memory_space<vmem>>, vector<16x128xf32>
    %cst_32 = arith.constant dense<0.000000e+00> : vector<128xf32>
    %27 = vector.multi_reduction <add>, %26, %cst_32 [0] : vector<16x128xf32> to vector<128xf32>
    %28 = vector.shape_cast %27 : vector<128xf32> to vector<1x128xf32>
    %c0_33 = arith.constant 0 : index
    %c0_34 = arith.constant 0 : index
    %29 = vector.load %arg7[%c0_33, %c0_34] : memref<128x128xf32, #tpu.memory_space<vmem>>, vector<128x128xf32>
    %cst_35 = arith.constant dense<0.000000e+00> : vector<1x128xf32>
    %30 = tpu.matmul %28, %29, %cst_35 {dimension_numbers = #tpu.dot_dimension_numbers<[1], [0], [0], [1], [0, 0, 1, 1], [], []>} : vector<1x128xf32>, vector<128x128xf32>, vector<1x128xf32> -> vector<1x128xf32>
    %cst_36 = arith.constant 5.120000e+02 : f32
    %31 = vector.broadcast %cst_36 : f32 to vector<1x128xf32>
    %32 = arith.divf %30, %31 : vector<1x128xf32>
    %33 = vector.broadcast %32 : vector<1x128xf32> to vector<16x128xf32>
    %34 = arith.subf %26, %33 : vector<16x128xf32>
    %35 = arith.mulf %34, %34 : vector<16x128xf32>
    %cst_37 = arith.constant dense<0.000000e+00> : vector<128xf32>
    %36 = vector.multi_reduction <add>, %35, %cst_37 [0] : vector<16x128xf32> to vector<128xf32>
    %37 = vector.shape_cast %36 : vector<128xf32> to vector<1x128xf32>
    %c0_38 = arith.constant 0 : index
    %c0_39 = arith.constant 0 : index
    %38 = vector.load %arg7[%c0_38, %c0_39] : memref<128x128xf32, #tpu.memory_space<vmem>>, vector<128x128xf32>
    %cst_40 = arith.constant dense<0.000000e+00> : vector<1x128xf32>
    %39 = tpu.matmul %37, %38, %cst_40 {dimension_numbers = #tpu.dot_dimension_numbers<[1], [0], [0], [1], [0, 0, 1, 1], [], []>} : vector<1x128xf32>, vector<128x128xf32>, vector<1x128xf32> -> vector<1x128xf32>
    %cst_41 = arith.constant 5.120000e+02 : f32
    %40 = vector.broadcast %cst_41 : f32 to vector<1x128xf32>
    %41 = arith.divf %39, %40 : vector<1x128xf32>
    %cst_42 = arith.constant 9.99999974E-6 : f32
    %42 = vector.broadcast %cst_42 : f32 to vector<1x128xf32>
    %43 = arith.addf %41, %42 : vector<1x128xf32>
    %44 = math.rsqrt %43 : vector<1x128xf32>
    %45 = vector.broadcast %44 : vector<1x128xf32> to vector<16x128xf32>
    %46 = arith.mulf %34, %45 : vector<16x128xf32>
    %c0_43 = arith.constant 0 : index
    %c0_44 = arith.constant 0 : index
    %47 = vector.load %arg3[%c0_43, %c0_44] : memref<1x128xf32, #tpu.memory_space<vmem>>, vector<1x128xf32>
    %48 = vector.broadcast %47 : vector<1x128xf32> to vector<16x128xf32>
    %49 = arith.mulf %46, %48 : vector<16x128xf32>
    %c0_45 = arith.constant 0 : index
    %c0_46 = arith.constant 0 : index
    %50 = vector.load %arg4[%c0_45, %c0_46] : memref<1x128xf32, #tpu.memory_space<vmem>>, vector<1x128xf32>
    %51 = vector.broadcast %50 : vector<1x128xf32> to vector<16x128xf32>
    %52 = arith.addf %49, %51 : vector<16x128xf32>
    %53 = arith.truncf %52 : vector<16x128xf32> to vector<16x128xbf16>
    %c16_47 = arith.constant 16 : index
    %c0_48 = arith.constant 0 : index
    %54 = vector.load %arg9[%c16_47, %c0_48] : memref<48x128xbf16, #tpu.memory_space<vmem>>, vector<16x128xbf16>
    tpu.vector_store %arg9[%c16_47, %c0_48], %53 {strides = array<i32>} : memref<48x128xbf16, #tpu.memory_space<vmem>>, vector<16x128xbf16>,
    %c15_49 = arith.constant 15 : index
    %c0_50 = arith.constant 0 : index
    %55 = vector.load %arg9[%c15_49, %c0_50] : memref<48x128xbf16, #tpu.memory_space<vmem>>, vector<16x128xbf16>
    %c0_51 = arith.constant 0 : index
    %c0_52 = arith.constant 0 : index
    %c0_53 = arith.constant 0 : index
    %56 = vector.load %arg2[%c0_51, %c0_52, %c0_53] : memref<3x128x128xbf16, #tpu.memory_space<vmem>>, vector<1x128x128xbf16>
    %57 = vector.shape_cast %56 : vector<1x128x128xbf16> to vector<128x128xbf16>
    %cst_54 = arith.constant dense<0.000000e+00> : vector<16x128xf32>
    %58 = tpu.matmul %55, %57, %cst_54 {dimension_numbers = #tpu.dot_dimension_numbers<[1], [0], [0], [1], [0, 0, 1, 1], [], []>} : vector<16x128xbf16>, vector<128x128xbf16>, vector<16x128xf32> -> vector<16x128xf32>
    %c0_55 = arith.constant 0 : index
    %c0_56 = arith.constant 0 : index
    %59 = vector.load %arg10[%c0_55, %c0_56] : memref<16x128xf32, #tpu.memory_space<vmem>>, vector<16x128xf32>
    tpu.vector_store %arg10[%c0_55, %c0_56], %58 {strides = array<i32>} : memref<16x128xf32, #tpu.memory_space<vmem>>, vector<16x128xf32>,
    %c0_57 = arith.constant 0 : index
    %c0_58 = arith.constant 0 : index
    %60 = vector.load %arg10[%c0_57, %c0_58] : memref<16x128xf32, #tpu.memory_space<vmem>>, vector<16x128xf32>
    %c16_59 = arith.constant 16 : index
    %c0_60 = arith.constant 0 : index
    %61 = vector.load %arg9[%c16_59, %c0_60] : memref<48x128xbf16, #tpu.memory_space<vmem>>, vector<16x128xbf16>
    %c1_61 = arith.constant 1 : index
    %c0_62 = arith.constant 0 : index
    %c0_63 = arith.constant 0 : index
    %62 = vector.load %arg2[%c1_61, %c0_62, %c0_63] : memref<3x128x128xbf16, #tpu.memory_space<vmem>>, vector<1x128x128xbf16>
    %63 = vector.shape_cast %62 : vector<1x128x128xbf16> to vector<128x128xbf16>
    %cst_64 = arith.constant dense<0.000000e+00> : vector<16x128xf32>
    %64 = tpu.matmul %61, %63, %cst_64 {dimension_numbers = #tpu.dot_dimension_numbers<[1], [0], [0], [1], [0, 0, 1, 1], [], []>} : vector<16x128xbf16>, vector<128x128xbf16>, vector<16x128xf32> -> vector<16x128xf32>
    %65 = arith.addf %60, %64 : vector<16x128xf32>
    %c0_65 = arith.constant 0 : index
    %c0_66 = arith.constant 0 : index
    %66 = vector.load %arg10[%c0_65, %c0_66] : memref<16x128xf32, #tpu.memory_space<vmem>>, vector<16x128xf32>
    tpu.vector_store %arg10[%c0_65, %c0_66], %65 {strides = array<i32>} : memref<16x128xf32, #tpu.memory_space<vmem>>, vector<16x128xf32>,
    %c0_67 = arith.constant 0 : index
    %c0_68 = arith.constant 0 : index
    %67 = vector.load %arg10[%c0_67, %c0_68] : memref<16x128xf32, #tpu.memory_space<vmem>>, vector<16x128xf32>
    %c17_69 = arith.constant 17 : index
    %c0_70 = arith.constant 0 : index
    %68 = vector.load %arg9[%c17_69, %c0_70] : memref<48x128xbf16, #tpu.memory_space<vmem>>, vector<16x128xbf16>
    %c2_71 = arith.constant 2 : index
    %c0_72 = arith.constant 0 : index
    %c0_73 = arith.constant 0 : index
    %69 = vector.load %arg2[%c2_71, %c0_72, %c0_73] : memref<3x128x128xbf16, #tpu.memory_space<vmem>>, vector<1x128x128xbf16>
    %70 = vector.shape_cast %69 : vector<1x128x128xbf16> to vector<128x128xbf16>
    %cst_74 = arith.constant dense<0.000000e+00> : vector<16x128xf32>
    %71 = tpu.matmul %68, %70, %cst_74 {dimension_numbers = #tpu.dot_dimension_numbers<[1], [0], [0], [1], [0, 0, 1, 1], [], []>} : vector<16x128xbf16>, vector<128x128xbf16>, vector<16x128xf32> -> vector<16x128xf32>
    %72 = arith.addf %67, %71 : vector<16x128xf32>
    %c0_75 = arith.constant 0 : index
    %c0_76 = arith.constant 0 : index
    %73 = vector.load %arg10[%c0_75, %c0_76] : memref<16x128xf32, #tpu.memory_space<vmem>>, vector<16x128xf32>
    tpu.vector_store %arg10[%c0_75, %c0_76], %72 {strides = array<i32>} : memref<16x128xf32, #tpu.memory_space<vmem>>, vector<16x128xf32>,
    %c0_77 = arith.constant 0 : index
    %c0_78 = arith.constant 0 : index
    %74 = vector.load %arg10[%c0_77, %c0_78] : memref<16x128xf32, #tpu.memory_space<vmem>>, vector<16x128xf32>
    %cst_79 = arith.constant dense<0.000000e+00> : vector<128xf32>
    %75 = vector.multi_reduction <add>, %74, %cst_79 [0] : vector<16x128xf32> to vector<128xf32>
    %76 = vector.shape_cast %75 : vector<128xf32> to vector<1x128xf32>
    %c0_80 = arith.constant 0 : index
    %c0_81 = arith.constant 0 : index
    %77 = vector.load %arg7[%c0_80, %c0_81] : memref<128x128xf32, #tpu.memory_space<vmem>>, vector<128x128xf32>
    %cst_82 = arith.constant dense<0.000000e+00> : vector<1x128xf32>
    %78 = tpu.matmul %76, %77, %cst_82 {dimension_numbers = #tpu.dot_dimension_numbers<[1], [0], [0], [1], [0, 0, 1, 1], [], []>} : vector<1x128xf32>, vector<128x128xf32>, vector<1x128xf32> -> vector<1x128xf32>
    %cst_83 = arith.constant 5.120000e+02 : f32
    %79 = vector.broadcast %cst_83 : f32 to vector<1x128xf32>
    %80 = arith.divf %78, %79 : vector<1x128xf32>
    %81 = vector.broadcast %80 : vector<1x128xf32> to vector<16x128xf32>
    %82 = arith.subf %74, %81 : vector<16x128xf32>
    %83 = arith.mulf %82, %82 : vector<16x128xf32>
    %cst_84 = arith.constant dense<0.000000e+00> : vector<128xf32>
    %84 = vector.multi_reduction <add>, %83, %cst_84 [0] : vector<16x128xf32> to vector<128xf32>
    %85 = vector.shape_cast %84 : vector<128xf32> to vector<1x128xf32>
    %c0_85 = arith.constant 0 : index
    %c0_86 = arith.constant 0 : index
    %86 = vector.load %arg7[%c0_85, %c0_86] : memref<128x128xf32, #tpu.memory_space<vmem>>, vector<128x128xf32>
    %cst_87 = arith.constant dense<0.000000e+00> : vector<1x128xf32>
    %87 = tpu.matmul %85, %86, %cst_87 {dimension_numbers = #tpu.dot_dimension_numbers<[1], [0], [0], [1], [0, 0, 1, 1], [], []>} : vector<1x128xf32>, vector<128x128xf32>, vector<1x128xf32> -> vector<1x128xf32>
    %cst_88 = arith.constant 5.120000e+02 : f32
    %88 = vector.broadcast %cst_88 : f32 to vector<1x128xf32>
    %89 = arith.divf %87, %88 : vector<1x128xf32>
    %cst_89 = arith.constant 9.99999974E-6 : f32
    %90 = vector.broadcast %cst_89 : f32 to vector<1x128xf32>
    %91 = arith.addf %89, %90 : vector<1x128xf32>
    %92 = math.rsqrt %91 : vector<1x128xf32>
    %93 = vector.broadcast %92 : vector<1x128xf32> to vector<16x128xf32>
    %94 = arith.mulf %82, %93 : vector<16x128xf32>
    %c0_90 = arith.constant 0 : index
    %c0_91 = arith.constant 0 : index
    %95 = vector.load %arg5[%c0_90, %c0_91] : memref<1x128xf32, #tpu.memory_space<vmem>>, vector<1x128xf32>
    %96 = vector.broadcast %95 : vector<1x128xf32> to vector<16x128xf32>
    %97 = arith.mulf %94, %96 : vector<16x128xf32>
    %c0_92 = arith.constant 0 : index
    %c0_93 = arith.constant 0 : index
    %98 = vector.load %arg6[%c0_92, %c0_93] : memref<1x128xf32, #tpu.memory_space<vmem>>, vector<1x128xf32>
    %99 = vector.broadcast %98 : vector<1x128xf32> to vector<16x128xf32>
    %100 = arith.addf %97, %99 : vector<16x128xf32>
    %c0_94 = arith.constant 0 : index
    %c0_95 = arith.constant 0 : index
    %101 = vector.load %arg0[%c0_94, %c0_95] : memref<16x128xf32, #tpu.memory_space<vmem>>, vector<16x128xf32>
    %102 = arith.addf %100, %101 : vector<16x128xf32>
    %cst_96 = arith.constant 0.000000e+00 : f32
    %103 = vector.broadcast %cst_96 : f32 to vector<16x128xf32>
    %104 = arith.maximumf %102, %103 : vector<16x128xf32>
    %c0_97 = arith.constant 0 : index
    %c0_98 = arith.constant 0 : index
    %105 = vector.load %arg8[%c0_97, %c0_98] : memref<16x128xf32, #tpu.memory_space<vmem>>, vector<16x128xf32>
    tpu.vector_store %arg8[%c0_97, %c0_98], %104 {strides = array<i32>} : memref<16x128xf32, #tpu.memory_space<vmem>>, vector<16x128xf32>,
    return
  }
}

</mosaic_0001>

<llo_original>
// kernel: residual_block.1
$region0: #{residual_block.1}
  #allocation0 [shape = 'u32[]', space=smem, size = 0x4, offset = 0x4, fixed_abs, tag = 'smem constant byte address 0x4 - core index']
  #allocation1 [shape = 'u32[144,128]{1,0:T(1,128)}', space=vmem, size = 0x12000, scoped, tag = 'internal scratch']
  #allocation2 [shape = 'bf16[48,128]{1,0:T(16,128)(2,1)}', space=vmem, size = 0x3000, scoped, tag = 'scratch operand']
  #allocation3 [shape = 'f32[16,128]{1,0:T(8,128)}', space=vmem, size = 0x2000, scoped, tag = 'scratch operand']
  %s0 = inlined_call_operand.vmem [shape: f32[16,128], index: 0, kind: input, shape index: {}]
  %s1 = inlined_call_operand.vmem [shape: bf16[3,128,128], index: 1, kind: input, shape index: {}]
  %s2 = inlined_call_operand.vmem [shape: bf16[3,128,128], index: 2, kind: input, shape index: {}]
  %s3 = inlined_call_operand.vmem [shape: f32[1,128], index: 3, kind: input, shape index: {}]
  %s4 = inlined_call_operand.vmem [shape: f32[1,128], index: 4, kind: input, shape index: {}]
  %s5 = inlined_call_operand.vmem [shape: f32[1,128], index: 5, kind: input, shape index: {}]
  %s6 = inlined_call_operand.vmem [shape: f32[1,128], index: 6, kind: input, shape index: {}]
  %s7 = inlined_call_operand.hbm [shape: f32[128,128], index: 7, kind: input, shape index: {}]
  %s8 = inlined_call_operand.vmem [shape: f32[16,128], index: 8, kind: output, shape index: {}]
  %s9 = sld [smem:[#allocation0]]
  $region46: #{residual_block.1} parent=0
    _
  %s11 = ssub.s32 1, %s9
  %s12 = scalar_select 0, %s11, %s9
  $region1: #{residual_block.1} parent=0
    #allocation4 [shape = 'u8[65536]{0}', space=vmem, size = 0x10000, scoped, tag = 'input window, operand 7, single buffered']
    #allocation5 [shape = 's32[1]{0}', space=sflag, size = 0x4, scoped, tag = 'scoped memory for residual_block.1']
    %13 = vsyncpa [#allocation5], 0
    // Predicated region
    $region2: #{residual_block.1} parent=1 // pred_check
      _
    $region3: #{residual_block.1} parent=1 // pred_check_branch
      %15 = sbr.rel (0) target = $region5
    $region4: #{residual_block.1} parent=1 // pred_region
      _
    $region5: #{residual_block.1} parent=1 // pred_fallthru
      _
    // Predicated region
    $region6: #{residual_block.1} parent=1 // pred_check
      _
    $region7: #{residual_block.1} parent=1 // pred_check_branch
      %17 = sbr.rel (0) target = $region9
    $region8: #{residual_block.1} parent=1 // pred_region
      _
    $region9: #{residual_block.1} parent=1 // pred_fallthru
      _
    // Predicated region
    $region10: #{residual_block.1} parent=1 // pred_check
      _
    $region11: #{residual_block.1} parent=1 // pred_check_branch
      %19 = sbr.rel (0) target = $region13
    $region12: #{residual_block.1} parent=1 // pred_region
      _
    $region13: #{residual_block.1} parent=1 // pred_fallthru
      _
    // Predicated region
    $region14: #{residual_block.1} parent=1 // pred_check
      _
    $region15: #{residual_block.1} parent=1 // pred_check_branch
      %21 = sbr.rel (0) target = $region17
    $region16: #{residual_block.1} parent=1 // pred_region
      _
    $region17: #{residual_block.1} parent=1 // pred_fallthru
      _
    // Predicated region
    $region18: #{residual_block.1} parent=1 // pred_check
      _
    $region19: #{residual_block.1} parent=1 // pred_check_branch
      %23 = sbr.rel (0) target = $region21
    $region20: #{residual_block.1} parent=1 // pred_region
      _
    $region21: #{residual_block.1} parent=1 // pred_fallthru
      _
    // Predicated region
    $region22: #{residual_block.1} parent=1 // pred_check
      _
    $region23: #{residual_block.1} parent=1 // pred_check_branch
      %25 = sbr.rel (0) target = $region25
    $region24: #{residual_block.1} parent=1 // pred_region
      _
    $region25: #{residual_block.1} parent=1 // pred_fallthru
      _
    // Predicated region
    $region26: #{residual_block.1} parent=1 // pred_check
      _
    $region27: #{residual_block.1} parent=1 // pred_check_branch
      %27 = sbr.rel (0) target = $region29
    $region28: #{residual_block.1} parent=1 // pred_region
      _
    $region29: #{residual_block.1} parent=1 // pred_fallthru
      _
    // Predicated region
    $region30: #{residual_block.1} parent=1 // pred_check
      _
    $region31: #{residual_block.1} parent=1 // pred_check_branch
      %29 = sbr.rel (0) target = $region33
    $region32: #{residual_block.1} parent=1 // pred_region
      %s31 = ssub.s32 2048, 2048
      %32 = vsyncadd [#allocation5], %s31
      %s33 = sshll.u32 [#allocation4], 4
      %s34 = int_to_ptr.vmem [resolvable:$true] %s33
      %39 = dma.hbm_to_vmem [thread:$0]  %s7, 2048, %s34, [#allocation5], 128, 128, 8
    $region33: #{residual_block.1} parent=1 // pred_fallthru
      _
    // Predicated region
    $region34: #{residual_block.1} parent=1 // pred_check
      _
    $region35: #{residual_block.1} parent=1 // pred_check_branch
      %41 = sbr.rel (0) target = $region37
    $region36: #{residual_block.1} parent=1 // pred_region
      %42 = dma.done [#allocation5], 2048
    $region37: #{residual_block.1} parent=1 // pred_fallthru
      _
    %44 = vst [vmem:[#allocation2] sm:$0xff] 0
    %45 = vst [vmem:[#allocation2 + $0x10] sm:$0xff] 0
    %v46 = vld [vmem:[%s0] sm:$0xff]
    %v47 = vld [vmem:[%s0 + $0x8] sm:$0xff]
    %v48 = vpack.c.bf16 %v47, %v46
    %49 = vst [vmem:[#allocation2 + $0x8] sm:$0xff] %v48
    %v50 = vld [vmem:[#allocation2] sm:$0x80]
    %v51 = vld [vmem:[#allocation2 + $0x8] sm:$0xff]
    %v52 = vld [vmem:[%s1] sm:$0xf]
    %v53 = vld [vmem:[%s1 + $0x4] sm:$0xf]
    %v54 = vld [vmem:[%s1 + $0x8] sm:$0xf]
    %v55 = vld [vmem:[%s1 + $0xc] sm:$0xf]
    %v56 = vld [vmem:[%s1 + $0x10] sm:$0xf]
    %v57 = vld [vmem:[%s1 + $0x14] sm:$0xf]
    %v58 = vld [vmem:[%s1 + $0x18] sm:$0xf]
    %v59 = vld [vmem:[%s1 + $0x1c] sm:$0xf]
    %v60 = vld [vmem:[%s1 + $0x20] sm:$0xf]
    %v61 = vld [vmem:[%s1 + $0x24] sm:$0xf]
    %v62 = vld [vmem:[%s1 + $0x28] sm:$0xf]
    %v63 = vld [vmem:[%s1 + $0x2c] sm:$0xf]
    %v64 = vld [vmem:[%s1 + $0x30] sm:$0xf]
    %v65 = vld [vmem:[%s1 + $0x34] sm:$0xf]
    %v66 = vld [vmem:[%s1 + $0x38] sm:$0xf]
    %v67 = vld [vmem:[%s1 + $0x3c] sm:$0xf]
    %vm68 = vsmask.f32 256
    %v70 = vshrl.u32 %v50, 16
    %v72 = vrot.slane %v70, 7
    %v74 = vshrl.u32 %v51, 16
    %v76 = vrot.slane %v74, 7
    %v77 = vshll.u32 %v51, 16
    %v79 = vor.u32 %v76, %v77
    %v80 = vsel %vm68, %v72, %v79
    %v98 = vunpack.c.l.b16 %v52
    %v99 = vunpack.c.l.b16 %v53
    %v100 = vunpack.c.l.b16 %v54
    %v101 = vunpack.c.l.b16 %v55
    %v102 = vunpack.c.l.b16 %v56
    %v103 = vunpack.c.l.b16 %v57
    %v104 = vunpack.c.l.b16 %v58
    %v105 = vunpack.c.l.b16 %v59
    %v106 = vunpack.c.l.b16 %v60
    %v107 = vunpack.c.l.b16 %v61
    %v108 = vunpack.c.l.b16 %v62
    %v109 = vunpack.c.l.b16 %v63
    %v110 = vunpack.c.l.b16 %v64
    %v111 = vunpack.c.l.b16 %v65
    %v112 = vunpack.c.l.b16 %v66
    %v113 = vunpack.c.l.b16 %v67
    %v114 = vpack.c.b16 %v99, %v98
    %v115 = vpack.c.b16 %v101, %v100
    %v116 = vpack.c.b16 %v103, %v102
    %v117 = vpack.c.b16 %v105, %v104
    %v118 = vpack.c.b16 %v107, %v106
    %v119 = vpack.c.b16 %v109, %v108
    %v120 = vpack.c.b16 %v111, %v110
    %v121 = vpack.c.b16 %v113, %v112
    %130 = vmatprep.subr.bf16.mxu0 0
    %131 = vmatpush1.bf16.msra.mxu0 %v114
    %132 = vmatprep.subr.bf16.mxu0 0
    %133 = vmatpush1.bf16.msra.mxu0 %v115
    %134 = vmatprep.subr.bf16.mxu0 0
    %135 = vmatpush1.bf16.msra.mxu0 %v116
    %136 = vmatprep.subr.bf16.mxu0 0
    %137 = vmatpush1.bf16.msra.mxu0 %v117
    %138 = vmatprep.subr.bf16.mxu0 0
    %139 = vmatpush1.bf16.msra.mxu0 %v118
    %140 = vmatprep.subr.bf16.mxu0 0
    %141 = vmatpush1.bf16.msra.mxu0 %v119
    %142 = vmatprep.subr.bf16.mxu0 0
    %143 = vmatpush1.bf16.msra.mxu0 %v120
    %144 = vmatprep.subr.bf16.mxu0 0
    %145 = vmatpush1.bf16.msra.mxu0 %v121
    %146 = vmatprep.subr.bf16.mxu0 0
    %147 = vmatpush1.bf16.msra.mxu0 0
    %148 = vmatprep.subr.bf16.mxu0 0
    %149 = vmatpush1.bf16.msra.mxu0 0
    %150 = vmatprep.subr.bf16.mxu0 0
    %151 = vmatpush1.bf16.msra.mxu0 0
    %152 = vmatprep.subr.bf16.mxu0 0
    %153 = vmatpush1.bf16.msra.mxu0 0
    %154 = vmatprep.subr.bf16.mxu0 0
    %155 = vmatpush1.bf16.msra.mxu0 0
    %156 = vmatprep.subr.bf16.mxu0 0
    %157 = vmatpush1.bf16.msra.mxu0 0
    %158 = vmatprep.subr.bf16.mxu0 0
    %159 = vmatpush1.bf16.msra.mxu0 0
    %160 = vmatprep.subr.bf16.mxu0 0
    %161 = vmatpush1.bf16.msra.mxu0 0
    %162 = vmatprep.mubr.bf16.mxu0 0
    %163 = vmatmul.mubr.bf16.gmra.mrb[0].mxu0 %v80
    %v164 = vpop.f32.mrb[0].mxu0
    %v165 = vadd.f32 0.0, %v164
    %v166 = vpop.f32.mrb[0].mxu0
    %v167 = vpop.f32.mrb[0].mxu0
    %v168 = vadd.f32 0.0, %v167
    %v169 = vpop.f32.mrb[0].mxu0
    %170 = vdwg.mxu0
    %171 = vst [vmem:[#allocation3] sm:$0xff] %v165
    %172 = vst [vmem:[#allocation3 + $0x8] sm:$0xff] %v168
    %v173 = vld [vmem:[#allocation3] sm:$0xff]
    %v174 = vld [vmem:[#allocation3 + $0x8] sm:$0xff]
    %v175 = vld [vmem:[#allocation2 + $0x8] sm:$0xff]
    %s176 = scalar_lea.vmem %s1, 64
    %v177 = vld [vmem:[%s176] sm:$0xf]
    %v178 = vld [vmem:[%s176 + $0x4] sm:$0xf]
    %v179 = vld [vmem:[%s176 + $0x8] sm:$0xf]
    %v180 = vld [vmem:[%s176 + $0xc] sm:$0xf]
    %v181 = vld [vmem:[%s176 + $0x10] sm:$0xf]
    %v182 = vld [vmem:[%s176 + $0x14] sm:$0xf]
    %v183 = vld [vmem:[%s176 + $0x18] sm:$0xf]
    %v184 = vld [vmem:[%s176 + $0x1c] sm:$0xf]
    %v185 = vld [vmem:[%s176 + $0x20] sm:$0xf]
    %v186 = vld [vmem:[%s176 + $0x24] sm:$0xf]
    %v187 = vld [vmem:[%s176 + $0x28] sm:$0xf]
    %v188 = vld [vmem:[%s176 + $0x2c] sm:$0xf]
    %v189 = vld [vmem:[%s176 + $0x30] sm:$0xf]
    %v190 = vld [vmem:[%s176 + $0x34] sm:$0xf]
    %v191 = vld [vmem:[%s176 + $0x38] sm:$0xf]
    %v192 = vld [vmem:[%s176 + $0x3c] sm:$0xf]
    %v209 = vunpack.c.l.b16 %v177
    %v210 = vunpack.c.l.b16 %v178
    %v211 = vunpack.c.l.b16 %v179
    %v212 = vunpack.c.l.b16 %v180
    %v213 = vunpack.c.l.b16 %v181
    %v214 = vunpack.c.l.b16 %v182
    %v215 = vunpack.c.l.b16 %v183
    %v216 = vunpack.c.l.b16 %v184
    %v217 = vunpack.c.l.b16 %v185
    %v218 = vunpack.c.l.b16 %v186
    %v219 = vunpack.c.l.b16 %v187
    %v220 = vunpack.c.l.b16 %v188
    %v221 = vunpack.c.l.b16 %v189
    %v222 = vunpack.c.l.b16 %v190
    %v223 = vunpack.c.l.b16 %v191
    %v224 = vunpack.c.l.b16 %v192
    %v225 = vpack.c.b16 %v210, %v209
    %v226 = vpack.c.b16 %v212, %v211
    %v227 = vpack.c.b16 %v214, %v213
    %v228 = vpack.c.b16 %v216, %v215
    %v229 = vpack.c.b16 %v218, %v217
    %v230 = vpack.c.b16 %v220, %v219
    %v231 = vpack.c.b16 %v222, %v221
    %v232 = vpack.c.b16 %v224, %v223
    %241 = vmatprep.subr.bf16.mxu0 0
    %242 = vmatpush1.bf16.msra.mxu0 %v225
    %243 = vmatprep.subr.bf16.mxu0 0
    %244 = vmatpush1.bf16.msra.mxu0 %v226
    %245 = vmatprep.subr.bf16.mxu0 0
    %246 = vmatpush1.bf16.msra.mxu0 %v227
    %247 = vmatprep.subr.bf16.mxu0 0
    %248 = vmatpush1.bf16.msra.mxu0 %v228
    %249 = vmatprep.subr.bf16.mxu0 0
    %250 = vmatpush1.bf16.msra.mxu0 %v229
    %251 = vmatprep.subr.bf16.mxu0 0
    %252 = vmatpush1.bf16.msra.mxu0 %v230
    %253 = vmatprep.subr.bf16.mxu0 0
    %254 = vmatpush1.bf16.msra.mxu0 %v231
    %255 = vmatprep.subr.bf16.mxu0 0
    %256 = vmatpush1.bf16.msra.mxu0 %v232
    %257 = vmatprep.subr.bf16.mxu0 0
    %258 = vmatpush1.bf16.msra.mxu0 0
    %259 = vmatprep.subr.bf16.mxu0 0
    %260 = vmatpush1.bf16.msra.mxu0 0
    %261 = vmatprep.subr.bf16.mxu0 0
    %262 = vmatpush1.bf16.msra.mxu0 0
    %263 = vmatprep.subr.bf16.mxu0 0
    %264 = vmatpush1.bf16.msra.mxu0 0
    %265 = vmatprep.subr.bf16.mxu0 0
    %266 = vmatpush1.bf16.msra.mxu0 0
    %267 = vmatprep.subr.bf16.mxu0 0
    %268 = vmatpush1.bf16.msra.mxu0 0
    %269 = vmatprep.subr.bf16.mxu0 0
    %270 = vmatpush1.bf16.msra.mxu0 0
    %271 = vmatprep.subr.bf16.mxu0 0
    %272 = vmatpush1.bf16.msra.mxu0 0
    %273 = vmatprep.mubr.bf16.mxu0 0
    %274 = vmatmul.mubr.bf16.gmra.mrb[0].mxu0 %v175
    %v275 = vpop.f32.mrb[0].mxu0
    %v276 = vadd.f32 0.0, %v275
    %v277 = vpop.f32.mrb[0].mxu0
    %v278 = vpop.f32.mrb[0].mxu0
    %v279 = vadd.f32 0.0, %v278
    %v280 = vpop.f32.mrb[0].mxu0
    %281 = vdwg.mxu0
    %v282 = vadd.f32 %v173, %v276
    %v283 = vadd.f32 %v174, %v279
    %284 = vst [vmem:[#allocation3] sm:$0xff] %v282
    %285 = vst [vmem:[#allocation3 + $0x8] sm:$0xff] %v283
    %v286 = vld [vmem:[#allocation3] sm:$0xff]
    %v287 = vld [vmem:[#allocation3 + $0x8] sm:$0xff]
    %v288 = vld [vmem:[#allocation2 + $0x8] sm:$0xff]
    %v289 = vld [vmem:[#allocation2 + $0x10] sm:$0x1]
    %s290 = scalar_lea.vmem %s1, 128
    %v291 = vld [vmem:[%s290] sm:$0xf]
    %v292 = vld [vmem:[%s290 + $0x4] sm:$0xf]
    %v293 = vld [vmem:[%s290 + $0x8] sm:$0xf]
    %v294 = vld [vmem:[%s290 + $0xc] sm:$0xf]
    %v295 = vld [vmem:[%s290 + $0x10] sm:$0xf]
    %v296 = vld [vmem:[%s290 + $0x14] sm:$0xf]
    %v297 = vld [vmem:[%s290 + $0x18] sm:$0xf]
    %v298 = vld [vmem:[%s290 + $0x1c] sm:$0xf]
    %v299 = vld [vmem:[%s290 + $0x20] sm:$0xf]
    %v300 = vld [vmem:[%s290 + $0x24] sm:$0xf]
    %v301 = vld [vmem:[%s290 + $0x28] sm:$0xf]
    %v302 = vld [vmem:[%s290 + $0x2c] sm:$0xf]
    %v303 = vld [vmem:[%s290 + $0x30] sm:$0xf]
    %v304 = vld [vmem:[%s290 + $0x34] sm:$0xf]
    %v305 = vld [vmem:[%s290 + $0x38] sm:$0xf]
    %v306 = vld [vmem:[%s290 + $0x3c] sm:$0xf]
    %vm307 = vsmask.f32 7424
    %v309 = vshrl.u32 %v288, 16
    %v311 = vshll.u32 %v288, 16
    %v313 = vrot.slane %v311, 1
    %v314 = vor.u32 %v309, %v313
    %v316 = vshll.u32 %v289, 16
    %v318 = vrot.slane %v316, 1
    %v319 = vsel %vm307, %v314, %v318
    %v337 = vunpack.c.l.b16 %v291
    %v338 = vunpack.c.l.b16 %v292
    %v339 = vunpack.c.l.b16 %v293
    %v340 = vunpack.c.l.b16 %v294
    %v341 = vunpack.c.l.b16 %v295
    %v342 = vunpack.c.l.b16 %v296
    %v343 = vunpack.c.l.b16 %v297
    %v344 = vunpack.c.l.b16 %v298
    %v345 = vunpack.c.l.b16 %v299
    %v346 = vunpack.c.l.b16 %v300
    %v347 = vunpack.c.l.b16 %v301
    %v348 = vunpack.c.l.b16 %v302
    %v349 = vunpack.c.l.b16 %v303
    %v350 = vunpack.c.l.b16 %v304
    %v351 = vunpack.c.l.b16 %v305
    %v352 = vunpack.c.l.b16 %v306
    %v353 = vpack.c.b16 %v338, %v337
    %v354 = vpack.c.b16 %v340, %v339
    %v355 = vpack.c.b16 %v342, %v341
    %v356 = vpack.c.b16 %v344, %v343
    %v357 = vpack.c.b16 %v346, %v345
    %v358 = vpack.c.b16 %v348, %v347
    %v359 = vpack.c.b16 %v350, %v349
    %v360 = vpack.c.b16 %v352, %v351
    %369 = vmatprep.subr.bf16.mxu0 0
    %370 = vmatpush1.bf16.msra.mxu0 %v353
    %371 = vmatprep.subr.bf16.mxu0 0
    %372 = vmatpush1.bf16.msra.mxu0 %v354
    %373 = vmatprep.subr.bf16.mxu0 0
    %374 = vmatpush1.bf16.msra.mxu0 %v355
    %375 = vmatprep.subr.bf16.mxu0 0
    %376 = vmatpush1.bf16.msra.mxu0 %v356
    %377 = vmatprep.subr.bf16.mxu0 0
    %378 = vmatpush1.bf16.msra.mxu0 %v357
    %379 = vmatprep.subr.bf16.mxu0 0
    %380 = vmatpush1.bf16.msra.mxu0 %v358
    %381 = vmatprep.subr.bf16.mxu0 0
    %382 = vmatpush1.bf16.msra.mxu0 %v359
    %383 = vmatprep.subr.bf16.mxu0 0
    %384 = vmatpush1.bf16.msra.mxu0 %v360
    %385 = vmatprep.subr.bf16.mxu0 0
    %386 = vmatpush1.bf16.msra.mxu0 0
    %387 = vmatprep.subr.bf16.mxu0 0
    %388 = vmatpush1.bf16.msra.mxu0 0
    %389 = vmatprep.subr.bf16.mxu0 0
    %390 = vmatpush1.bf16.msra.mxu0 0
    %391 = vmatprep.subr.bf16.mxu0 0
    %392 = vmatpush1.bf16.msra.mxu0 0
    %393 = vmatprep.subr.bf16.mxu0 0
    %394 = vmatpush1.bf16.msra.mxu0 0
    %395 = vmatprep.subr.bf16.mxu0 0
    %396 = vmatpush1.bf16.msra.mxu0 0
    %397 = vmatprep.subr.bf16.mxu0 0
    %398 = vmatpush1.bf16.msra.mxu0 0
    %399 = vmatprep.subr.bf16.mxu0 0
    %400 = vmatpush1.bf16.msra.mxu0 0
    %401 = vmatprep.mubr.bf16.mxu0 0
    %402 = vmatmul.mubr.bf16.gmra.mrb[0].mxu0 %v319
    %v403 = vpop.f32.mrb[0].mxu0
    %v404 = vadd.f32 0.0, %v403
    %v405 = vpop.f32.mrb[0].mxu0
    %v406 = vpop.f32.mrb[0].mxu0
    %v407 = vadd.f32 0.0, %v406
    %v408 = vpop.f32.mrb[0].mxu0
    %409 = vdwg.mxu0
    %v410 = vadd.f32 %v286, %v404
    %v411 = vadd.f32 %v287, %v407
    %412 = vst [vmem:[#allocation3] sm:$0xff] %v410
    %413 = vst [vmem:[#allocation3 + $0x8] sm:$0xff] %v411
    %v414 = vld [vmem:[#allocation3] sm:$0xff]
    %v415 = vld [vmem:[#allocation3 + $0x8] sm:$0xff]
    %v416 = vadd.f32 %v414, %v415
    %v417 = vrot.slane %v416, 4
    %v418 = vadd.f32 %v416, %v417
    %v419 = vrot.slane %v418, 2
    %v420 = vadd.f32 %v418, %v419
    %v421 = vrot.slane %v420, 1
    %v422 = vadd.f32 %v420, %v421
    %v423 = vld [vmem:[#allocation4] sm:$0xff]
    %v424 = vld [vmem:[#allocation4 + $0x8] sm:$0xff]
    %v425 = vld [vmem:[#allocation4 + $0x10] sm:$0xff]
    %v426 = vld [vmem:[#allocation4 + $0x18] sm:$0xff]
    %v427 = vld [vmem:[#allocation4 + $0x20] sm:$0xff]
    %v428 = vld [vmem:[#allocation4 + $0x28] sm:$0xff]
    %v429 = vld [vmem:[#allocation4 + $0x30] sm:$0xff]
    %v430 = vld [vmem:[#allocation4 + $0x38] sm:$0xff]
    %v431 = vld [vmem:[#allocation4 + $0x40] sm:$0xff]
    %v432 = vld [vmem:[#allocation4 + $0x48] sm:$0xff]
    %v433 = vld [vmem:[#allocation4 + $0x50] sm:$0xff]
    %v434 = vld [vmem:[#allocation4 + $0x58] sm:$0xff]
    %v435 = vld [vmem:[#allocation4 + $0x60] sm:$0xff]
    %v436 = vld [vmem:[#allocation4 + $0x68] sm:$0xff]
    %v437 = vld [vmem:[#allocation4 + $0x70] sm:$0xff]
    %v438 = vld [vmem:[#allocation4 + $0x78] sm:$0xff]
    %439 = vmatprep.subr.mxu0 0.0
    %440 = vmatpush1.msra.mxu0 %v423
    %441 = vmatprep.subr.mxu0 0.0
    %442 = vmatpush1.msra.mxu0 %v424
    %443 = vmatprep.subr.mxu0 0.0
    %444 = vmatpush1.msra.mxu0 %v425
    %445 = vmatprep.subr.mxu0 0.0
    %446 = vmatpush1.msra.mxu0 %v426
    %447 = vmatprep.subr.mxu0 0.0
    %448 = vmatpush1.msra.mxu0 %v427
    %449 = vmatprep.subr.mxu0 0.0
    %450 = vmatpush1.msra.mxu0 %v428
    %451 = vmatprep.subr.mxu0 0.0
    %452 = vmatpush1.msra.mxu0 %v429
    %453 = vmatprep.subr.mxu0 0.0
    %454 = vmatpush1.msra.mxu0 %v430
    %455 = vmatprep.subr.mxu0 0.0
    %456 = vmatpush1.msra.mxu0 %v431
    %457 = vmatprep.subr.mxu0 0.0
    %458 = vmatpush1.msra.mxu0 %v432
    %459 = vmatprep.subr.mxu0 0.0
    %460 = vmatpush1.msra.mxu0 %v433
    %461 = vmatprep.subr.mxu0 0.0
    %462 = vmatpush1.msra.mxu0 %v434
    %463 = vmatprep.subr.mxu0 0.0
    %464 = vmatpush1.msra.mxu0 %v435
    %465 = vmatprep.subr.mxu0 0.0
    %466 = vmatpush1.msra.mxu0 %v436
    %467 = vmatprep.subr.mxu0 0.0
    %468 = vmatpush1.msra.mxu0 %v437
    %469 = vmatprep.subr.mxu0 0.0
    %470 = vmatpush1.msra.mxu0 %v438
    %471 = vmatprep.subr.mxu0 0.0
    %472 = vmatpush1.msra.mxu0 0.0
    %473 = vmatprep.subr.mxu0 0.0
    %474 = vmatpush1.msra.mxu0 0.0
    %475 = vmatprep.subr.mxu0 0.0
    %476 = vmatpush1.msra.mxu0 0.0
    %477 = vmatprep.subr.mxu0 0.0
    %478 = vmatpush1.msra.mxu0 0.0
    %479 = vmatprep.subr.mxu0 0.0
    %480 = vmatpush1.msra.mxu0 0.0
    %481 = vmatprep.subr.mxu0 0.0
    %482 = vmatpush1.msra.mxu0 0.0
    %483 = vmatprep.subr.mxu0 0.0
    %484 = vmatpush1.msra.mxu0 0.0
    %485 = vmatprep.subr.mxu0 0.0
    %486 = vmatpush1.msra.mxu0 0.0
    %487 = vmatprep.subr.mxu0 0.0
    %488 = vmatpush1.msra.mxu0 0.0
    %489 = vmatprep.subr.mxu0 0.0
    %490 = vmatpush1.msra.mxu0 0.0
    %491 = vmatprep.subr.mxu0 0.0
    %492 = vmatpush1.msra.mxu0 0.0
    %493 = vmatprep.subr.mxu0 0.0
    %494 = vmatpush1.msra.mxu0 0.0
    %495 = vmatprep.subr.mxu0 0.0
    %496 = vmatpush1.msra.mxu0 0.0
    %497 = vmatprep.subr.mxu0 0.0
    %498 = vmatpush1.msra.mxu0 0.0
    %499 = vmatprep.subr.mxu0 0.0
    %500 = vmatpush1.msra.mxu0 0.0
    %501 = vmatprep.subr.mxu0 0.0
    %502 = vmatpush1.msra.mxu0 0.0
    %503 = vmatprep.mubr.f32.mxu0 0.0
    %504 = vmatmul.mubr.f32.gmra.mrb[0].mxu0 %v422
    %v505 = vpop.f32.mrb[0].mxu0
    %v506 = vadd.f32 0.0, %v505
    %v507 = vpop.f32.mrb[0].mxu0
    %508 = vdwg.mxu0
    %v509 = vrcp.pop 512.0
    %v510 = vmul.f32 %v506, %v509
    %v511 = vlaneseq
    %v512 = vshrl.u32 %v511, 7
    %v513 = vsub.s32 0, %v512
    %v514 = vrot.slane %v510, %v513
    %v515 = vsub.f32 %v414, %v514
    %v516 = vsub.f32 %v415, %v514
    %v517 = vmul.f32 %v515, %v515
    %v518 = vmul.f32 %v516, %v516
    %v519 = vadd.f32 %v517, %v518
    %v520 = vrot.slane %v519, 4
    %v521 = vadd.f32 %v519, %v520
    %v522 = vrot.slane %v521, 2
    %v523 = vadd.f32 %v521, %v522
    %v524 = vrot.slane %v523, 1
    %v525 = vadd.f32 %v523, %v524
    %526 = vmatprep.subr.mxu0 0.0
    %527 = vmatpush1.msra.mxu0 %v423
    %528 = vmatprep.subr.mxu0 0.0
    %529 = vmatpush1.msra.mxu0 %v424
    %530 = vmatprep.subr.mxu0 0.0
    %531 = vmatpush1.msra.mxu0 %v425
    %532 = vmatprep.subr.mxu0 0.0
    %533 = vmatpush1.msra.mxu0 %v426
    %534 = vmatprep.subr.mxu0 0.0
    %535 = vmatpush1.msra.mxu0 %v427
    %536 = vmatprep.subr.mxu0 0.0
    %537 = vmatpush1.msra.mxu0 %v428
    %538 = vmatprep.subr.mxu0 0.0
    %539 = vmatpush1.msra.mxu0 %v429
    %540 = vmatprep.subr.mxu0 0.0
    %541 = vmatpush1.msra.mxu0 %v430
    %542 = vmatprep.subr.mxu0 0.0
    %543 = vmatpush1.msra.mxu0 %v431
    %544 = vmatprep.subr.mxu0 0.0
    %545 = vmatpush1.msra.mxu0 %v432
    %546 = vmatprep.subr.mxu0 0.0
    %547 = vmatpush1.msra.mxu0 %v433
    %548 = vmatprep.subr.mxu0 0.0
    %549 = vmatpush1.msra.mxu0 %v434
    %550 = vmatprep.subr.mxu0 0.0
    %551 = vmatpush1.msra.mxu0 %v435
    %552 = vmatprep.subr.mxu0 0.0
    %553 = vmatpush1.msra.mxu0 %v436
    %554 = vmatprep.subr.mxu0 0.0
    %555 = vmatpush1.msra.mxu0 %v437
    %556 = vmatprep.subr.mxu0 0.0
    %557 = vmatpush1.msra.mxu0 %v438
    %558 = vmatprep.subr.mxu0 0.0
    %559 = vmatpush1.msra.mxu0 0.0
    %560 = vmatprep.subr.mxu0 0.0
    %561 = vmatpush1.msra.mxu0 0.0
    %562 = vmatprep.subr.mxu0 0.0
    %563 = vmatpush1.msra.mxu0 0.0
    %564 = vmatprep.subr.mxu0 0.0
    %565 = vmatpush1.msra.mxu0 0.0
    %566 = vmatprep.subr.mxu0 0.0
    %567 = vmatpush1.msra.mxu0 0.0
    %568 = vmatprep.subr.mxu0 0.0
    %569 = vmatpush1.msra.mxu0 0.0
    %570 = vmatprep.subr.mxu0 0.0
    %571 = vmatpush1.msra.mxu0 0.0
    %572 = vmatprep.subr.mxu0 0.0
    %573 = vmatpush1.msra.mxu0 0.0
    %574 = vmatprep.subr.mxu0 0.0
    %575 = vmatpush1.msra.mxu0 0.0
    %576 = vmatprep.subr.mxu0 0.0
    %577 = vmatpush1.msra.mxu0 0.0
    %578 = vmatprep.subr.mxu0 0.0
    %579 = vmatpush1.msra.mxu0 0.0
    %580 = vmatprep.subr.mxu0 0.0
    %581 = vmatpush1.msra.mxu0 0.0
    %582 = vmatprep.subr.mxu0 0.0
    %583 = vmatpush1.msra.mxu0 0.0
    %584 = vmatprep.subr.mxu0 0.0
    %585 = vmatpush1.msra.mxu0 0.0
    %586 = vmatprep.subr.mxu0 0.0
    %587 = vmatpush1.msra.mxu0 0.0
    %588 = vmatprep.subr.mxu0 0.0
    %589 = vmatpush1.msra.mxu0 0.0
    %590 = vmatprep.mubr.f32.mxu0 0.0
    %591 = vmatmul.mubr.f32.gmra.mrb[0].mxu0 %v525
    %v592 = vpop.f32.mrb[0].mxu0
    %v593 = vadd.f32 0.0, %v592
    %v594 = vpop.f32.mrb[0].mxu0
    %595 = vdwg.mxu0
    %v596 = vmul.f32 %v593, %v509
    %v597 = vadd.f32 %v596, 1e-05
    %v598 = vrsqrt.pop %v597
    %v599 = vlaneseq
    %v600 = vshrl.u32 %v599, 7
    %v601 = vsub.s32 0, %v600
    %v602 = vrot.slane %v598, %v601
    %v603 = vmul.f32 %v515, %v602
    %v604 = vmul.f32 %v516, %v602
    %v605 = vld [vmem:[%s3] sm:$0x1]
    %v607 = vlaneseq
    %v608 = vshrl.u32 %v607, 7
    %v609 = vsub.s32 0, %v608
    %v610 = vrot.slane %v605, %v609
    %v612 = vmul.f32 %v603, %v610
    %v613 = vmul.f32 %v604, %v610
    %v614 = vld [vmem:[%s4] sm:$0x1]
    %v616 = vlaneseq
    %v617 = vshrl.u32 %v616, 7
    %v618 = vsub.s32 0, %v617
    %v619 = vrot.slane %v614, %v618
    %v621 = vadd.f32 %v612, %v619
    %v622 = vadd.f32 %v613, %v619
    %v623 = vpack.c.bf16 %v622, %v621
    %624 = vst [vmem:[#allocation2 + $0x8] sm:$0xff] %v623
    %v625 = vld [vmem:[#allocation2] sm:$0x80]
    %v626 = vld [vmem:[#allocation2 + $0x8] sm:$0xff]
    %v627 = vld [vmem:[%s2] sm:$0xf]
    %v628 = vld [vmem:[%s2 + $0x4] sm:$0xf]
    %v629 = vld [vmem:[%s2 + $0x8] sm:$0xf]
    %v630 = vld [vmem:[%s2 + $0xc] sm:$0xf]
    %v631 = vld [vmem:[%s2 + $0x10] sm:$0xf]
    %v632 = vld [vmem:[%s2 + $0x14] sm:$0xf]
    %v633 = vld [vmem:[%s2 + $0x18] sm:$0xf]
    %v634 = vld [vmem:[%s2 + $0x1c] sm:$0xf]
    %v635 = vld [vmem:[%s2 + $0x20] sm:$0xf]
    %v636 = vld [vmem:[%s2 + $0x24] sm:$0xf]
    %v637 = vld [vmem:[%s2 + $0x28] sm:$0xf]
    %v638 = vld [vmem:[%s2 + $0x2c] sm:$0xf]
    %v639 = vld [vmem:[%s2 + $0x30] sm:$0xf]
    %v640 = vld [vmem:[%s2 + $0x34] sm:$0xf]
    %v641 = vld [vmem:[%s2 + $0x38] sm:$0xf]
    %v642 = vld [vmem:[%s2 + $0x3c] sm:$0xf]
    %v644 = vshrl.u32 %v625, 16
    %v646 = vrot.slane %v644, 7
    %v648 = vshrl.u32 %v626, 16
    %v650 = vrot.slane %v648, 7
    %v651 = vshll.u32 %v626, 16
    %v653 = vor.u32 %v650, %v651
    %v654 = vsel %vm68, %v646, %v653
    %v672 = vunpack.c.l.b16 %v627
    %v673 = vunpack.c.l.b16 %v628
    %v674 = vunpack.c.l.b16 %v629
    %v675 = vunpack.c.l.b16 %v630
    %v676 = vunpack.c.l.b16 %v631
    %v677 = vunpack.c.l.b16 %v632
    %v678 = vunpack.c.l.b16 %v633
    %v679 = vunpack.c.l.b16 %v634
    %v680 = vunpack.c.l.b16 %v635
    %v681 = vunpack.c.l.b16 %v636
    %v682 = vunpack.c.l.b16 %v637
    %v683 = vunpack.c.l.b16 %v638
    %v684 = vunpack.c.l.b16 %v639
    %v685 = vunpack.c.l.b16 %v640
    %v686 = vunpack.c.l.b16 %v641
    %v687 = vunpack.c.l.b16 %v642
    %v688 = vpack.c.b16 %v673, %v672
    %v689 = vpack.c.b16 %v675, %v674
    %v690 = vpack.c.b16 %v677, %v676
    %v691 = vpack.c.b16 %v679, %v678
    %v692 = vpack.c.b16 %v681, %v680
    %v693 = vpack.c.b16 %v683, %v682
    %v694 = vpack.c.b16 %v685, %v684
    %v695 = vpack.c.b16 %v687, %v686
    %704 = vmatprep.subr.bf16.mxu0 0
    %705 = vmatpush1.bf16.msra.mxu0 %v688
    %706 = vmatprep.subr.bf16.mxu0 0
    %707 = vmatpush1.bf16.msra.mxu0 %v689
    %708 = vmatprep.subr.bf16.mxu0 0
    %709 = vmatpush1.bf16.msra.mxu0 %v690
    %710 = vmatprep.subr.bf16.mxu0 0
    %711 = vmatpush1.bf16.msra.mxu0 %v691
    %712 = vmatprep.subr.bf16.mxu0 0
    %713 = vmatpush1.bf16.msra.mxu0 %v692
    %714 = vmatprep.subr.bf16.mxu0 0
    %715 = vmatpush1.bf16.msra.mxu0 %v693
    %716 = vmatprep.subr.bf16.mxu0 0
    %717 = vmatpush1.bf16.msra.mxu0 %v694
    %718 = vmatprep.subr.bf16.mxu0 0
    %719 = vmatpush1.bf16.msra.mxu0 %v695
    %720 = vmatprep.subr.bf16.mxu0 0
    %721 = vmatpush1.bf16.msra.mxu0 0
    %722 = vmatprep.subr.bf16.mxu0 0
    %723 = vmatpush1.bf16.msra.mxu0 0
    %724 = vmatprep.subr.bf16.mxu0 0
    %725 = vmatpush1.bf16.msra.mxu0 0
    %726 = vmatprep.subr.bf16.mxu0 0
    %727 = vmatpush1.bf16.msra.mxu0 0
    %728 = vmatprep.subr.bf16.mxu0 0
    %729 = vmatpush1.bf16.msra.mxu0 0
    %730 = vmatprep.subr.bf16.mxu0 0
    %731 = vmatpush1.bf16.msra.mxu0 0
    %732 = vmatprep.subr.bf16.mxu0 0
    %733 = vmatpush1.bf16.msra.mxu0 0
    %734 = vmatprep.subr.bf16.mxu0 0
    %735 = vmatpush1.bf16.msra.mxu0 0
    %736 = vmatprep.mubr.bf16.mxu0 0
    %737 = vmatmul.mubr.bf16.gmra.mrb[0].mxu0 %v654
    %v738 = vpop.f32.mrb[0].mxu0
    %v739 = vadd.f32 0.0, %v738
    %v740 = vpop.f32.mrb[0].mxu0
    %v741 = vpop.f32.mrb[0].mxu0
    %v742 = vadd.f32 0.0, %v741
    %v743 = vpop.f32.mrb[0].mxu0
    %744 = vdwg.mxu0
    %745 = vst [vmem:[#allocation3] sm:$0xff] %v739
    %746 = vst [vmem:[#allocation3 + $0x8] sm:$0xff] %v742
    %v747 = vld [vmem:[#allocation3] sm:$0xff]
    %v748 = vld [vmem:[#allocation3 + $0x8] sm:$0xff]
    %v749 = vld [vmem:[#allocation2 + $0x8] sm:$0xff]
    %s750 = scalar_lea.vmem %s2, 64
    %v751 = vld [vmem:[%s750] sm:$0xf]
    %v752 = vld [vmem:[%s750 + $0x4] sm:$0xf]
    %v753 = vld [vmem:[%s750 + $0x8] sm:$0xf]
    %v754 = vld [vmem:[%s750 + $0xc] sm:$0xf]
    %v755 = vld [vmem:[%s750 + $0x10] sm:$0xf]
    %v756 = vld [vmem:[%s750 + $0x14] sm:$0xf]
    %v757 = vld [vmem:[%s750 + $0x18] sm:$0xf]
    %v758 = vld [vmem:[%s750 + $0x1c] sm:$0xf]
    %v759 = vld [vmem:[%s750 + $0x20] sm:$0xf]
    %v760 = vld [vmem:[%s750 + $0x24] sm:$0xf]
    %v761 = vld [vmem:[%s750 + $0x28] sm:$0xf]
    %v762 = vld [vmem:[%s750 + $0x2c] sm:$0xf]
    %v763 = vld [vmem:[%s750 + $0x30] sm:$0xf]
    %v764 = vld [vmem:[%s750 + $0x34] sm:$0xf]
    %v765 = vld [vmem:[%s750 + $0x38] sm:$0xf]
    %v766 = vld [vmem:[%s750 + $0x3c] sm:$0xf]
    %v783 = vunpack.c.l.b16 %v751
    %v784 = vunpack.c.l.b16 %v752
    %v785 = vunpack.c.l.b16 %v753
    %v786 = vunpack.c.l.b16 %v754
    %v787 = vunpack.c.l.b16 %v755
    %v788 = vunpack.c.l.b16 %v756
    %v789 = vunpack.c.l.b16 %v757
    %v790 = vunpack.c.l.b16 %v758
    %v791 = vunpack.c.l.b16 %v759
    %v792 = vunpack.c.l.b16 %v760
    %v793 = vunpack.c.l.b16 %v761
    %v794 = vunpack.c.l.b16 %v762
    %v795 = vunpack.c.l.b16 %v763
    %v796 = vunpack.c.l.b16 %v764
    %v797 = vunpack.c.l.b16 %v765
    %v798 = vunpack.c.l.b16 %v766
    %v799 = vpack.c.b16 %v784, %v783
    %v800 = vpack.c.b16 %v786, %v785
    %v801 = vpack.c.b16 %v788, %v787
    %v802 = vpack.c.b16 %v790, %v789
    %v803 = vpack.c.b16 %v792, %v791
    %v804 = vpack.c.b16 %v794, %v793
    %v805 = vpack.c.b16 %v796, %v795
    %v806 = vpack.c.b16 %v798, %v797
    %815 = vmatprep.subr.bf16.mxu0 0
    %816 = vmatpush1.bf16.msra.mxu0 %v799
    %817 = vmatprep.subr.bf16.mxu0 0
    %818 = vmatpush1.bf16.msra.mxu0 %v800
    %819 = vmatprep.subr.bf16.mxu0 0
    %820 = vmatpush1.bf16.msra.mxu0 %v801
    %821 = vmatprep.subr.bf16.mxu0 0
    %822 = vmatpush1.bf16.msra.mxu0 %v802
    %823 = vmatprep.subr.bf16.mxu0 0
    %824 = vmatpush1.bf16.msra.mxu0 %v803
    %825 = vmatprep.subr.bf16.mxu0 0
    %826 = vmatpush1.bf16.msra.mxu0 %v804
    %827 = vmatprep.subr.bf16.mxu0 0
    %828 = vmatpush1.bf16.msra.mxu0 %v805
    %829 = vmatprep.subr.bf16.mxu0 0
    %830 = vmatpush1.bf16.msra.mxu0 %v806
    %831 = vmatprep.subr.bf16.mxu0 0
    %832 = vmatpush1.bf16.msra.mxu0 0
    %833 = vmatprep.subr.bf16.mxu0 0
    %834 = vmatpush1.bf16.msra.mxu0 0
    %835 = vmatprep.subr.bf16.mxu0 0
    %836 = vmatpush1.bf16.msra.mxu0 0
    %837 = vmatprep.subr.bf16.mxu0 0
    %838 = vmatpush1.bf16.msra.mxu0 0
    %839 = vmatprep.subr.bf16.mxu0 0
    %840 = vmatpush1.bf16.msra.mxu0 0
    %841 = vmatprep.subr.bf16.mxu0 0
    %842 = vmatpush1.bf16.msra.mxu0 0
    %843 = vmatprep.subr.bf16.mxu0 0
    %844 = vmatpush1.bf16.msra.mxu0 0
    %845 = vmatprep.subr.bf16.mxu0 0
    %846 = vmatpush1.bf16.msra.mxu0 0
    %847 = vmatprep.mubr.bf16.mxu0 0
    %848 = vmatmul.mubr.bf16.gmra.mrb[0].mxu0 %v749
    %v849 = vpop.f32.mrb[0].mxu0
    %v850 = vadd.f32 0.0, %v849
    %v851 = vpop.f32.mrb[0].mxu0
    %v852 = vpop.f32.mrb[0].mxu0
    %v853 = vadd.f32 0.0, %v852
    %v854 = vpop.f32.mrb[0].mxu0
    %855 = vdwg.mxu0
    %v856 = vadd.f32 %v747, %v850
    %v857 = vadd.f32 %v748, %v853
    %858 = vst [vmem:[#allocation3] sm:$0xff] %v856
    %859 = vst [vmem:[#allocation3 + $0x8] sm:$0xff] %v857
    %v860 = vld [vmem:[#allocation3] sm:$0xff]
    %v861 = vld [vmem:[#allocation3 + $0x8] sm:$0xff]
    %v862 = vld [vmem:[#allocation2 + $0x8] sm:$0xff]
    %v863 = vld [vmem:[#allocation2 + $0x10] sm:$0x1]
    %s864 = scalar_lea.vmem %s2, 128
    %v865 = vld [vmem:[%s864] sm:$0xf]
    %v866 = vld [vmem:[%s864 + $0x4] sm:$0xf]
    %v867 = vld [vmem:[%s864 + $0x8] sm:$0xf]
    %v868 = vld [vmem:[%s864 + $0xc] sm:$0xf]
    %v869 = vld [vmem:[%s864 + $0x10] sm:$0xf]
    %v870 = vld [vmem:[%s864 + $0x14] sm:$0xf]
    %v871 = vld [vmem:[%s864 + $0x18] sm:$0xf]
    %v872 = vld [vmem:[%s864 + $0x1c] sm:$0xf]
    %v873 = vld [vmem:[%s864 + $0x20] sm:$0xf]
    %v874 = vld [vmem:[%s864 + $0x24] sm:$0xf]
    %v875 = vld [vmem:[%s864 + $0x28] sm:$0xf]
    %v876 = vld [vmem:[%s864 + $0x2c] sm:$0xf]
    %v877 = vld [vmem:[%s864 + $0x30] sm:$0xf]
    %v878 = vld [vmem:[%s864 + $0x34] sm:$0xf]
    %v879 = vld [vmem:[%s864 + $0x38] sm:$0xf]
    %v880 = vld [vmem:[%s864 + $0x3c] sm:$0xf]
    %v882 = vshrl.u32 %v862, 16
    %v884 = vshll.u32 %v862, 16
    %v886 = vrot.slane %v884, 1
    %v887 = vor.u32 %v882, %v886
    %v889 = vshll.u32 %v863, 16
    %v891 = vrot.slane %v889, 1
    %v892 = vsel %vm307, %v887, %v891
    %v910 = vunpack.c.l.b16 %v865
    %v911 = vunpack.c.l.b16 %v866
    %v912 = vunpack.c.l.b16 %v867
    %v913 = vunpack.c.l.b16 %v868
    %v914 = vunpack.c.l.b16 %v869
    %v915 = vunpack.c.l.b16 %v870
    %v916 = vunpack.c.l.b16 %v871
    %v917 = vunpack.c.l.b16 %v872
    %v918 = vunpack.c.l.b16 %v873
    %v919 = vunpack.c.l.b16 %v874
    %v920 = vunpack.c.l.b16 %v875
    %v921 = vunpack.c.l.b16 %v876
    %v922 = vunpack.c.l.b16 %v877
    %v923 = vunpack.c.l.b16 %v878
    %v924 = vunpack.c.l.b16 %v879
    %v925 = vunpack.c.l.b16 %v880
    %v926 = vpack.c.b16 %v911, %v910
    %v927 = vpack.c.b16 %v913, %v912
    %v928 = vpack.c.b16 %v915, %v914
    %v929 = vpack.c.b16 %v917, %v916
    %v930 = vpack.c.b16 %v919, %v918
    %v931 = vpack.c.b16 %v921, %v920
    %v932 = vpack.c.b16 %v923, %v922
    %v933 = vpack.c.b16 %v925, %v924
    %942 = vmatprep.subr.bf16.mxu0 0
    %943 = vmatpush1.bf16.msra.mxu0 %v926
    %944 = vmatprep.subr.bf16.mxu0 0
    %945 = vmatpush1.bf16.msra.mxu0 %v927
    %946 = vmatprep.subr.bf16.mxu0 0
    %947 = vmatpush1.bf16.msra.mxu0 %v928
    %948 = vmatprep.subr.bf16.mxu0 0
    %949 = vmatpush1.bf16.msra.mxu0 %v929
    %950 = vmatprep.subr.bf16.mxu0 0
    %951 = vmatpush1.bf16.msra.mxu0 %v930
    %952 = vmatprep.subr.bf16.mxu0 0
    %953 = vmatpush1.bf16.msra.mxu0 %v931
    %954 = vmatprep.subr.bf16.mxu0 0
    %955 = vmatpush1.bf16.msra.mxu0 %v932
    %956 = vmatprep.subr.bf16.mxu0 0
    %957 = vmatpush1.bf16.msra.mxu0 %v933
    %958 = vmatprep.subr.bf16.mxu0 0
    %959 = vmatpush1.bf16.msra.mxu0 0
    %960 = vmatprep.subr.bf16.mxu0 0
    %961 = vmatpush1.bf16.msra.mxu0 0
    %962 = vmatprep.subr.bf16.mxu0 0
    %963 = vmatpush1.bf16.msra.mxu0 0
    %964 = vmatprep.subr.bf16.mxu0 0
    %965 = vmatpush1.bf16.msra.mxu0 0
    %966 = vmatprep.subr.bf16.mxu0 0
    %967 = vmatpush1.bf16.msra.mxu0 0
    %968 = vmatprep.subr.bf16.mxu0 0
    %969 = vmatpush1.bf16.msra.mxu0 0
    %970 = vmatprep.subr.bf16.mxu0 0
    %971 = vmatpush1.bf16.msra.mxu0 0
    %972 = vmatprep.subr.bf16.mxu0 0
    %973 = vmatpush1.bf16.msra.mxu0 0
    %974 = vmatprep.mubr.bf16.mxu0 0
    %975 = vmatmul.mubr.bf16.gmra.mrb[0].mxu0 %v892
    %v976 = vpop.f32.mrb[0].mxu0
    %v977 = vadd.f32 0.0, %v976
    %v978 = vpop.f32.mrb[0].mxu0
    %v979 = vpop.f32.mrb[0].mxu0
    %v980 = vadd.f32 0.0, %v979
    %v981 = vpop.f32.mrb[0].mxu0
    %982 = vdwg.mxu0
    %v983 = vadd.f32 %v860, %v977
    %v984 = vadd.f32 %v861, %v980
    %985 = vst [vmem:[#allocation3] sm:$0xff] %v983
    %986 = vst [vmem:[#allocation3 + $0x8] sm:$0xff] %v984
    %v987 = vld [vmem:[#allocation3] sm:$0xff]
    %v988 = vld [vmem:[#allocation3 + $0x8] sm:$0xff]
    %v989 = vadd.f32 %v987, %v988
    %v990 = vrot.slane %v989, 4
    %v991 = vadd.f32 %v989, %v990
    %v992 = vrot.slane %v991, 2
    %v993 = vadd.f32 %v991, %v992
    %v994 = vrot.slane %v993, 1
    %v995 = vadd.f32 %v993, %v994
    %v996 = vld [vmem:[#allocation4] sm:$0xff]
    %v997 = vld [vmem:[#allocation4 + $0x8] sm:$0xff]
    %v998 = vld [vmem:[#allocation4 + $0x10] sm:$0xff]
    %v999 = vld [vmem:[#allocation4 + $0x18] sm:$0xff]
    %v1000 = vld [vmem:[#allocation4 + $0x20] sm:$0xff]
    %v1001 = vld [vmem:[#allocation4 + $0x28] sm:$0xff]
    %v1002 = vld [vmem:[#allocation4 + $0x30] sm:$0xff]
    %v1003 = vld [vmem:[#allocation4 + $0x38] sm:$0xff]
    %v1004 = vld [vmem:[#allocation4 + $0x40] sm:$0xff]
    %v1005 = vld [vmem:[#allocation4 + $0x48] sm:$0xff]
    %v1006 = vld [vmem:[#allocation4 + $0x50] sm:$0xff]
    %v1007 = vld [vmem:[#allocation4 + $0x58] sm:$0xff]
    %v1008 = vld [vmem:[#allocation4 + $0x60] sm:$0xff]
    %v1009 = vld [vmem:[#allocation4 + $0x68] sm:$0xff]
    %v1010 = vld [vmem:[#allocation4 + $0x70] sm:$0xff]
    %v1011 = vld [vmem:[#allocation4 + $0x78] sm:$0xff]
    %1012 = vmatprep.subr.mxu0 0.0
    %1013 = vmatpush1.msra.mxu0 %v996
    %1014 = vmatprep.subr.mxu0 0.0
    %1015 = vmatpush1.msra.mxu0 %v997
    %1016 = vmatprep.subr.mxu0 0.0
    %1017 = vmatpush1.msra.mxu0 %v998
    %1018 = vmatprep.subr.mxu0 0.0
    %1019 = vmatpush1.msra.mxu0 %v999
    %1020 = vmatprep.subr.mxu0 0.0
    %1021 = vmatpush1.msra.mxu0 %v1000
    %1022 = vmatprep.subr.mxu0 0.0
    %1023 = vmatpush1.msra.mxu0 %v1001
    %1024 = vmatprep.subr.mxu0 0.0
    %1025 = vmatpush1.msra.mxu0 %v1002
    %1026 = vmatprep.subr.mxu0 0.0
    %1027 = vmatpush1.msra.mxu0 %v1003
    %1028 = vmatprep.subr.mxu0 0.0
    %1029 = vmatpush1.msra.mxu0 %v1004
    %1030 = vmatprep.subr.mxu0 0.0
    %1031 = vmatpush1.msra.mxu0 %v1005
    %1032 = vmatprep.subr.mxu0 0.0
    %1033 = vmatpush1.msra.mxu0 %v1006
    %1034 = vmatprep.subr.mxu0 0.0
    %1035 = vmatpush1.msra.mxu0 %v1007
    %1036 = vmatprep.subr.mxu0 0.0
    %1037 = vmatpush1.msra.mxu0 %v1008
    %1038 = vmatprep.subr.mxu0 0.0
    %1039 = vmatpush1.msra.mxu0 %v1009
    %1040 = vmatprep.subr.mxu0 0.0
    %1041 = vmatpush1.msra.mxu0 %v1010
    %1042 = vmatprep.subr.mxu0 0.0
    %1043 = vmatpush1.msra.mxu0 %v1011
    %1044 = vmatprep.subr.mxu0 0.0
    %1045 = vmatpush1.msra.mxu0 0.0
    %1046 = vmatprep.subr.mxu0 0.0
    %1047 = vmatpush1.msra.mxu0 0.0
    %1048 = vmatprep.subr.mxu0 0.0
    %1049 = vmatpush1.msra.mxu0 0.0
    %1050 = vmatprep.subr.mxu0 0.0
    %1051 = vmatpush1.msra.mxu0 0.0
    %1052 = vmatprep.subr.mxu0 0.0
    %1053 = vmatpush1.msra.mxu0 0.0
    %1054 = vmatprep.subr.mxu0 0.0
    %1055 = vmatpush1.msra.mxu0 0.0
    %1056 = vmatprep.subr.mxu0 0.0
    %1057 = vmatpush1.msra.mxu0 0.0
    %1058 = vmatprep.subr.mxu0 0.0
    %1059 = vmatpush1.msra.mxu0 0.0
    %1060 = vmatprep.subr.mxu0 0.0
    %1061 = vmatpush1.msra.mxu0 0.0
    %1062 = vmatprep.subr.mxu0 0.0
    %1063 = vmatpush1.msra.mxu0 0.0
    %1064 = vmatprep.subr.mxu0 0.0
    %1065 = vmatpush1.msra.mxu0 0.0
    %1066 = vmatprep.subr.mxu0 0.0
    %1067 = vmatpush1.msra.mxu0 0.0
    %1068 = vmatprep.subr.mxu0 0.0
    %1069 = vmatpush1.msra.mxu0 0.0
    %1070 = vmatprep.subr.mxu0 0.0
    %1071 = vmatpush1.msra.mxu0 0.0
    %1072 = vmatprep.subr.mxu0 0.0
    %1073 = vmatpush1.msra.mxu0 0.0
    %1074 = vmatprep.subr.mxu0 0.0
    %1075 = vmatpush1.msra.mxu0 0.0
    %1076 = vmatprep.mubr.f32.mxu0 0.0
    %1077 = vmatmul.mubr.f32.gmra.mrb[0].mxu0 %v995
    %v1078 = vpop.f32.mrb[0].mxu0
    %v1079 = vadd.f32 0.0, %v1078
    %v1080 = vpop.f32.mrb[0].mxu0
    %1081 = vdwg.mxu0
    %v1082 = vmul.f32 %v1079, %v509
    %v1083 = vlaneseq
    %v1084 = vshrl.u32 %v1083, 7
    %v1085 = vsub.s32 0, %v1084
    %v1086 = vrot.slane %v1082, %v1085
    %v1087 = vsub.f32 %v987, %v1086
    %v1088 = vsub.f32 %v988, %v1086
    %v1089 = vmul.f32 %v1087, %v1087
    %v1090 = vmul.f32 %v1088, %v1088
    %v1091 = vadd.f32 %v1089, %v1090
    %v1092 = vrot.slane %v1091, 4
    %v1093 = vadd.f32 %v1091, %v1092
    %v1094 = vrot.slane %v1093, 2
    %v1095 = vadd.f32 %v1093, %v1094
    %v1096 = vrot.slane %v1095, 1
    %v1097 = vadd.f32 %v1095, %v1096
    %1098 = vmatprep.subr.mxu0 0.0
    %1099 = vmatpush1.msra.mxu0 %v996
    %1100 = vmatprep.subr.mxu0 0.0
    %1101 = vmatpush1.msra.mxu0 %v997
    %1102 = vmatprep.subr.mxu0 0.0
    %1103 = vmatpush1.msra.mxu0 %v998
    %1104 = vmatprep.subr.mxu0 0.0
    %1105 = vmatpush1.msra.mxu0 %v999
    %1106 = vmatprep.subr.mxu0 0.0
    %1107 = vmatpush1.msra.mxu0 %v1000
    %1108 = vmatprep.subr.mxu0 0.0
    %1109 = vmatpush1.msra.mxu0 %v1001
    %1110 = vmatprep.subr.mxu0 0.0
    %1111 = vmatpush1.msra.mxu0 %v1002
    %1112 = vmatprep.subr.mxu0 0.0
    %1113 = vmatpush1.msra.mxu0 %v1003
    %1114 = vmatprep.subr.mxu0 0.0
    %1115 = vmatpush1.msra.mxu0 %v1004
    %1116 = vmatprep.subr.mxu0 0.0
    %1117 = vmatpush1.msra.mxu0 %v1005
    %1118 = vmatprep.subr.mxu0 0.0
    %1119 = vmatpush1.msra.mxu0 %v1006
    %1120 = vmatprep.subr.mxu0 0.0
    %1121 = vmatpush1.msra.mxu0 %v1007
    %1122 = vmatprep.subr.mxu0 0.0
    %1123 = vmatpush1.msra.mxu0 %v1008
    %1124 = vmatprep.subr.mxu0 0.0
    %1125 = vmatpush1.msra.mxu0 %v1009
    %1126 = vmatprep.subr.mxu0 0.0
    %1127 = vmatpush1.msra.mxu0 %v1010
    %1128 = vmatprep.subr.mxu0 0.0
    %1129 = vmatpush1.msra.mxu0 %v1011
    %1130 = vmatprep.subr.mxu0 0.0
    %1131 = vmatpush1.msra.mxu0 0.0
    %1132 = vmatprep.subr.mxu0 0.0
    %1133 = vmatpush1.msra.mxu0 0.0
    %1134 = vmatprep.subr.mxu0 0.0
    %1135 = vmatpush1.msra.mxu0 0.0
    %1136 = vmatprep.subr.mxu0 0.0
    %1137 = vmatpush1.msra.mxu0 0.0
    %1138 = vmatprep.subr.mxu0 0.0
    %1139 = vmatpush1.msra.mxu0 0.0
    %1140 = vmatprep.subr.mxu0 0.0
    %1141 = vmatpush1.msra.mxu0 0.0
    %1142 = vmatprep.subr.mxu0 0.0
    %1143 = vmatpush1.msra.mxu0 0.0
    %1144 = vmatprep.subr.mxu0 0.0
    %1145 = vmatpush1.msra.mxu0 0.0
    %1146 = vmatprep.subr.mxu0 0.0
    %1147 = vmatpush1.msra.mxu0 0.0
    %1148 = vmatprep.subr.mxu0 0.0
    %1149 = vmatpush1.msra.mxu0 0.0
    %1150 = vmatprep.subr.mxu0 0.0
    %1151 = vmatpush1.msra.mxu0 0.0
    %1152 = vmatprep.subr.mxu0 0.0
    %1153 = vmatpush1.msra.mxu0 0.0
    %1154 = vmatprep.subr.mxu0 0.0
    %1155 = vmatpush1.msra.mxu0 0.0
    %1156 = vmatprep.subr.mxu0 0.0
    %1157 = vmatpush1.msra.mxu0 0.0
    %1158 = vmatprep.subr.mxu0 0.0
    %1159 = vmatpush1.msra.mxu0 0.0
    %1160 = vmatprep.subr.mxu0 0.0
    %1161 = vmatpush1.msra.mxu0 0.0
    %1162 = vmatprep.mubr.f32.mxu0 0.0
    %1163 = vmatmul.mubr.f32.gmra.mrb[0].mxu0 %v1097
    %v1164 = vpop.f32.mrb[0].mxu0
    %v1165 = vadd.f32 0.0, %v1164
    %v1166 = vpop.f32.mrb[0].mxu0
    %1167 = vdwg.mxu0
    %v1168 = vmul.f32 %v1165, %v509
    %v1169 = vadd.f32 %v1168, 1e-05
    %v1170 = vrsqrt.pop %v1169
    %v1171 = vlaneseq
    %v1172 = vshrl.u32 %v1171, 7
    %v1173 = vsub.s32 0, %v1172
    %v1174 = vrot.slane %v1170, %v1173
    %v1175 = vmul.f32 %v1087, %v1174
    %v1176 = vmul.f32 %v1088, %v1174
    %v1177 = vld [vmem:[%s5] sm:$0x1]
    %v1179 = vlaneseq
    %v1180 = vshrl.u32 %v1179, 7
    %v1181 = vsub.s32 0, %v1180
    %v1182 = vrot.slane %v1177, %v1181
    %v1184 = vmul.f32 %v1175, %v1182
    %v1185 = vmul.f32 %v1176, %v1182
    %v1186 = vld [vmem:[%s6] sm:$0x1]
    %v1188 = vlaneseq
    %v1189 = vshrl.u32 %v1188, 7
    %v1190 = vsub.s32 0, %v1189
    %v1191 = vrot.slane %v1186, %v1190
    %v1193 = vadd.f32 %v1184, %v1191
    %v1194 = vadd.f32 %v1185, %v1191
    %v1195 = vld [vmem:[%s0] sm:$0xff]
    %v1196 = vld [vmem:[%s0 + $0x8] sm:$0xff]
    %v1197 = vadd.f32 %v1193, %v1195
    %v1198 = vadd.f32 %v1194, %v1196
    %v1199 = vmax.f32 %v1197, 0.0
    %v1200 = vmax.f32 %v1198, 0.0
    %1201 = vst [vmem:[%s8] sm:$0xff] %v1199
    %1202 = vst [vmem:[%s8 + $0x8] sm:$0xff] %v1200
    // Predicated region
    $region38: #{residual_block.1} parent=1 // pred_check
      _
    $region39: #{residual_block.1} parent=1 // pred_check_branch
      %1204 = sbr.rel (0) target = $region41
    $region40: #{residual_block.1} parent=1 // pred_region
      _
    $region41: #{residual_block.1} parent=1 // pred_fallthru
      _
    // Predicated region
    $region42: #{residual_block.1} parent=1 // pred_check
      _
    $region43: #{residual_block.1} parent=1 // pred_check_branch
      %1206 = sbr.rel (0) target = $region45
    $region44: #{residual_block.1} parent=1 // pred_region
      _
    $region45: #{residual_block.1} parent=1 // pred_fallthru
      _
    %1207 = vsyncpa [#allocation5], 1

</llo_original>
